<compile_context>
chip_gen: v6e
topology: v6e:2x2x1
jax: 0.10.0
libtpu: 0.0.40
codegen_flags: <defaults>
</compile_context>

<pallas_src>
import functools

import jax
import jax.numpy as jnp
from jax.experimental import pallas as pl
from jax.experimental.pallas import tpu as pltpu


def _concat_linear_kernel(a_ref, v_ref, wa_ref, wv_ref, b_ref, o_ref):
    """Y = concat(A, V) @ W.T + b  ==  A @ W_a + V @ W_v + b.

    A: (B, 5), V: (B, 5), W_a/W_v: (5, 5), b: (1, 5). Everything is a single
    whole-array VMEM block; the two tiny contractions go through jnp.dot.
    """
    acc = jnp.dot(a_ref[...], wa_ref[...], preferred_element_type=jnp.float32)
    acc = acc + jnp.dot(v_ref[...], wv_ref[...], preferred_element_type=jnp.float32)
    o_ref[...] = (acc + b_ref[...]).astype(o_ref.dtype)


def _vmem_full(shape):
    # Whole-array block resident in VMEM (gridless call -> zero-arg index_map).
    return pl.BlockSpec(
        shape,
        lambda: tuple(0 for _ in shape),
        memory_space=pltpu.MemorySpace.VMEM,
    )


def make_model_av_forward(weight, bias):
    """Builds the forward fn, hoisting all weight packing to parameter-load time.

    weight: (5, 10) PyTorch (out, in) layout; bias: (5,).
    Returns forward(A, V) -> (B, 5).
    """
    out_f, in_f = weight.shape                      # (5, 10)
    half = in_f // 2                                # 5 audio feats, 5 video feats

    # One-time constant packing (NOT in the per-call path).
    w_a = jnp.asarray(weight[:, :half].T, dtype=jnp.float32)        # (5, 5)
    w_v = jnp.asarray(weight[:, half:].T, dtype=jnp.float32)        # (5, 5)
    b_row = jnp.asarray(bias, dtype=jnp.float32).reshape(1, out_f)  # (1, 5)

    @jax.jit
    def forward(A, V):
        B = A.shape[0]
        A = A.astype(jnp.float32)
        V = V.astype(jnp.float32)
        flops = 2 * B * in_f * out_f
        bytes_accessed = 4 * (B * in_f + in_f * out_f + out_f + B * out_f)
        return pl.pallas_call(
            _concat_linear_kernel,
            out_shape=jax.ShapeDtypeStruct((B, out_f), jnp.float32),
            in_specs=[
                _vmem_full((B, half)),
                _vmem_full((B, half)),
                _vmem_full((half, out_f)),
                _vmem_full((half, out_f)),
                _vmem_full((1, out_f)),
            ],
            out_specs=_vmem_full((B, out_f)),
            cost_estimate=pl.CostEstimate(
                flops=flops, transcendentals=0, bytes_accessed=bytes_accessed
            ),
        )(A, V, w_a, w_v, b_row)

    return forward


def model_av_ref(A, V, weight, bias):
    y = jnp.concatenate([A, V], axis=1)
    return y @ weight.T + bias


if __name__ == "__main__":
    key = jax.random.PRNGKey(0)
    k_a, k_v, k_w, k_b = jax.random.split(key, 4)

    B = 2
    # Outputs of the (untranslatable) audio / video feature extractors.
    A_feat = jax.random.normal(k_a, (B, 5), dtype=jnp.float32)
    V_feat = jax.random.normal(k_v, (B, 5), dtype=jnp.float32)

    # Deterministic Linear(10, 5) parameters (PyTorch layout: (out, in)).
    bound = 1.0 / jnp.sqrt(10.0)
    weight = jax.random.uniform(k_w, (5, 10), jnp.float32, -bound, bound)
    bias = jax.random.uniform(k_b, (5,), jnp.float32, -bound, bound)

    # Parameter-load-time packing happens once here.
    forward = make_model_av_forward(weight, bias)

    out = forward(A_feat, V_feat)
    out = jax.block_until_ready(out)

    ref = model_av_ref(A_feat, V_feat, weight, bias)
    assert out.shape == (B, 5)
    assert jnp.allclose(out, ref, atol=1e-5, rtol=1e-5), (out, ref)

    print("KERNEL_OK")
</pallas_src>

<mosaic_0001>
module attributes {stable_mosaic.version = 11 : i64} {
  func.func @_concat_linear_kernel(%arg0: memref<2x5xf32, #tpu.memory_space<vmem>>, %arg1: memref<2x5xf32, #tpu.memory_space<vmem>>, %arg2: memref<5x5xf32, #tpu.memory_space<vmem>>, %arg3: memref<5x5xf32, #tpu.memory_space<vmem>>, %arg4: memref<1x5xf32, #tpu.memory_space<vmem>>, %arg5: memref<2x5xf32, #tpu.memory_space<vmem>>) attributes {dimension_semantics = [], scalar_prefetch = 0 : i64, scratch_operands = 0 : i64, tpu.core_type = #tpu.core_type<tc>} {
    %c0 = arith.constant 0 : index
    %c0_0 = arith.constant 0 : index
    %0 = vector.load %arg0[%c0, %c0_0] : memref<2x5xf32, #tpu.memory_space<vmem>>, vector<2x5xf32>
    %c0_1 = arith.constant 0 : index
    %c0_2 = arith.constant 0 : index
    %1 = vector.load %arg2[%c0_1, %c0_2] : memref<5x5xf32, #tpu.memory_space<vmem>>, vector<5x5xf32>
    %cst = arith.constant dense<0.000000e+00> : vector<2x5xf32>
    %2 = tpu.matmul %0, %1, %cst {dimension_numbers = #tpu.dot_dimension_numbers<[1], [0], [0], [1], [0, 0, 1, 1], [], []>} : vector<2x5xf32>, vector<5x5xf32>, vector<2x5xf32> -> vector<2x5xf32>
    %c0_3 = arith.constant 0 : index
    %c0_4 = arith.constant 0 : index
    %3 = vector.load %arg1[%c0_3, %c0_4] : memref<2x5xf32, #tpu.memory_space<vmem>>, vector<2x5xf32>
    %c0_5 = arith.constant 0 : index
    %c0_6 = arith.constant 0 : index
    %4 = vector.load %arg3[%c0_5, %c0_6] : memref<5x5xf32, #tpu.memory_space<vmem>>, vector<5x5xf32>
    %cst_7 = arith.constant dense<0.000000e+00> : vector<2x5xf32>
    %5 = tpu.matmul %3, %4, %cst_7 {dimension_numbers = #tpu.dot_dimension_numbers<[1], [0], [0], [1], [0, 0, 1, 1], [], []>} : vector<2x5xf32>, vector<5x5xf32>, vector<2x5xf32> -> vector<2x5xf32>
    %6 = arith.addf %2, %5 : vector<2x5xf32>
    %c0_8 = arith.constant 0 : index
    %c0_9 = arith.constant 0 : index
    %7 = vector.load %arg4[%c0_8, %c0_9] : memref<1x5xf32, #tpu.memory_space<vmem>>, vector<1x5xf32>
    %8 = vector.broadcast %7 : vector<1x5xf32> to vector<2x5xf32>
    %9 = arith.addf %6, %8 : vector<2x5xf32>
    %c0_10 = arith.constant 0 : index
    %c0_11 = arith.constant 0 : index
    %10 = vector.load %arg5[%c0_10, %c0_11] : memref<2x5xf32, #tpu.memory_space<vmem>>, vector<2x5xf32>
    tpu.vector_store %arg5[%c0_10, %c0_11], %9 {strides = array<i32>} : memref<2x5xf32, #tpu.memory_space<vmem>>, vector<2x5xf32>,
    return
  }
}

</mosaic_0001>

<llo_original>
// kernel: forward.1
$region0: #{forward.1}
  #allocation0 [shape = 'u32[]', space=smem, size = 0x4, offset = 0x4, fixed_abs, tag = 'smem constant byte address 0x4 - core index']
  #allocation1 [shape = 'u32[144,128]{1,0:T(1,128)}', space=vmem, size = 0x12000, scoped, tag = 'internal scratch']
  %s0 = inlined_call_operand.hbm [shape: f32[2,5], index: 0, kind: input, shape index: {}]
  %s1 = inlined_call_operand.hbm [shape: f32[2,5], index: 1, kind: input, shape index: {}]
  %s2 = inlined_call_operand.hbm [shape: f32[5,5], index: 2, kind: input, shape index: {}]
  %s3 = inlined_call_operand.hbm [shape: f32[5,5], index: 3, kind: input, shape index: {}]
  %s4 = inlined_call_operand.vmem [shape: f32[1,5], index: 4, kind: input, shape index: {}]
  %s5 = inlined_call_operand.hbm [shape: f32[2,5], index: 5, kind: output, shape index: {}]
  %s6 = sld [smem:[#allocation0]]
  $region46: #{forward.1} parent=0
    _
  %s8 = ssub.s32 1, %s6
  %s9 = scalar_select 0, %s8, %s6
  $region1: #{forward.1} parent=0
    #allocation2 [shape = 'u8[1024]{0}', space=vmem, size = 0x400, scoped, tag = 'input window, operand 0, single buffered']
    #allocation3 [shape = 's32[1]{0}', space=sflag, size = 0x4, scoped, tag = 'scoped memory for forward.1']
    #allocation4 [shape = 's32[1]{0}', space=sflag, size = 0x4, scoped, tag = 'scoped memory for forward.1']
    #allocation5 [shape = 'u8[1024]{0}', space=vmem, size = 0x400, scoped, tag = 'input window, operand 1, single buffered']
    #allocation6 [shape = 's32[1]{0}', space=sflag, size = 0x4, scoped, tag = 'scoped memory for forward.1']
    #allocation7 [shape = 'u8[4096]{0}', space=vmem, size = 0x1000, scoped, tag = 'input window, operand 2, single buffered']
    #allocation8 [shape = 'u8[4096]{0}', space=vmem, size = 0x1000, scoped, tag = 'input window, operand 3, single buffered']
    #allocation9 [shape = 's32[1]{0}', space=sflag, size = 0x4, scoped, tag = 'scoped memory for forward.1']
    #allocation10 [shape = 'u8[1024]{0}', space=vmem, size = 0x400, scoped, tag = 'output window, operand 0, single buffered']
    %10 = vsyncpa [#allocation3], 0
    %11 = vsyncpa [#allocation6], 0
    %12 = vsyncpa [#allocation9], 0
    %13 = vsyncpa [#allocation4], 0
    // Predicated region
    $region2: #{forward.1} parent=1 // pred_check
      _
    $region3: #{forward.1} parent=1 // pred_check_branch
      %15 = sbr.rel (0) target = $region5
    $region4: #{forward.1} parent=1 // pred_region
      %s17 = ssub.s32 32, 32
      %18 = vsyncadd [#allocation3], %s17
      %s20 = sshll.u32 [#allocation2], 4
      %s21 = int_to_ptr.vmem [resolvable:$true] %s20
      %23 = dma.hbm_to_vmem [thread:$0]  %s0, 32, %s21, [#allocation3]
    $region5: #{forward.1} parent=1 // pred_fallthru
      _
    // Predicated region
    $region6: #{forward.1} parent=1 // pred_check
      _
    $region7: #{forward.1} parent=1 // pred_check_branch
      %25 = sbr.rel (0) target = $region9
    $region8: #{forward.1} parent=1 // pred_region
      %s27 = ssub.s32 32, 32
      %28 = vsyncadd [#allocation6], %s27
      %s30 = sshll.u32 [#allocation5], 4
      %s31 = int_to_ptr.vmem [resolvable:$true] %s30
      %33 = dma.hbm_to_vmem [thread:$0]  %s1, 32, %s31, [#allocation6]
    $region9: #{forward.1} parent=1 // pred_fallthru
      _
    // Predicated region
    $region10: #{forward.1} parent=1 // pred_check
      _
    $region11: #{forward.1} parent=1 // pred_check_branch
      %35 = sbr.rel (0) target = $region13
    $region12: #{forward.1} parent=1 // pred_region
      %s37 = ssub.s32 128, 128
      %38 = vsyncadd [#allocation6], %s37
      %s40 = sshll.u32 [#allocation7], 4
      %s41 = int_to_ptr.vmem [resolvable:$true] %s40
      %43 = dma.hbm_to_vmem [thread:$0]  %s2, 128, %s41, [#allocation6]
    $region13: #{forward.1} parent=1 // pred_fallthru
      _
    // Predicated region
    $region14: #{forward.1} parent=1 // pred_check
      _
    $region15: #{forward.1} parent=1 // pred_check_branch
      %45 = sbr.rel (0) target = $region17
    $region16: #{forward.1} parent=1 // pred_region
      %s47 = ssub.s32 128, 128
      %48 = vsyncadd [#allocation9], %s47
      %s50 = sshll.u32 [#allocation8], 4
      %s51 = int_to_ptr.vmem [resolvable:$true] %s50
      %53 = dma.hbm_to_vmem [thread:$0]  %s3, 128, %s51, [#allocation9]
    $region17: #{forward.1} parent=1 // pred_fallthru
      _
    // Predicated region
    $region18: #{forward.1} parent=1 // pred_check
      _
    $region19: #{forward.1} parent=1 // pred_check_branch
      %55 = sbr.rel (0) target = $region21
    $region20: #{forward.1} parent=1 // pred_region
      _
    $region21: #{forward.1} parent=1 // pred_fallthru
      _
    // Predicated region
    $region22: #{forward.1} parent=1 // pred_check
      _
    $region23: #{forward.1} parent=1 // pred_check_branch
      %57 = sbr.rel (0) target = $region25
    $region24: #{forward.1} parent=1 // pred_region
      %58 = dma.done [#allocation3], 32
    $region25: #{forward.1} parent=1 // pred_fallthru
      _
    // Predicated region
    $region26: #{forward.1} parent=1 // pred_check
      _
    $region27: #{forward.1} parent=1 // pred_check_branch
      %60 = sbr.rel (0) target = $region29
    $region28: #{forward.1} parent=1 // pred_region
      %61 = dma.done [#allocation6], 32
    $region29: #{forward.1} parent=1 // pred_fallthru
      _
    // Predicated region
    $region30: #{forward.1} parent=1 // pred_check
      _
    $region31: #{forward.1} parent=1 // pred_check_branch
      %63 = sbr.rel (0) target = $region33
    $region32: #{forward.1} parent=1 // pred_region
      %64 = dma.done [#allocation6], 128
    $region33: #{forward.1} parent=1 // pred_fallthru
      _
    // Predicated region
    $region34: #{forward.1} parent=1 // pred_check
      _
    $region35: #{forward.1} parent=1 // pred_check_branch
      %66 = sbr.rel (0) target = $region37
    $region36: #{forward.1} parent=1 // pred_region
      %67 = dma.done [#allocation9], 128
    $region37: #{forward.1} parent=1 // pred_fallthru
      _
    %v68 = vld [vmem:[#allocation2] sm:$0x3]
    %v69 = vld [vmem:[#allocation7] sm:$0x1f]
    %v70 = vld [vmem:[#allocation5] sm:$0x3]
    %v71 = vld [vmem:[#allocation8] sm:$0x1f]
    %vm72 = vcmask 39936
    %v74 = vsel %vm72, %v70, 0
    %vm76 = vcmask 1044480
    %v78 = vsel %vm76, %v71, 0
    %80 = vmatprep.subr.mxu0 0.0
    %81 = vmatpush1.msra.mxu0 0.0
    %82 = vmatprep.subr.mxu0 0.0
    %83 = vmatpush1.msra.mxu0 0.0
    %84 = vmatprep.subr.mxu0 0.0
    %85 = vmatpush1.msra.mxu0 0.0
    %86 = vmatprep.subr.mxu0 0.0
    %87 = vmatpush1.msra.mxu0 0.0
    %88 = vmatprep.subr.mxu0 0.0
    %89 = vmatpush1.msra.mxu0 0.0
    %90 = vmatprep.subr.mxu0 0.0
    %91 = vmatpush1.msra.mxu0 0.0
    %92 = vmatprep.subr.mxu0 0.0
    %93 = vmatpush1.msra.mxu0 0.0
    %94 = vmatprep.subr.mxu0 0.0
    %95 = vmatpush1.msra.mxu0 0.0
    %96 = vmatprep.subr.mxu0 0.0
    %97 = vmatpush1.msra.mxu0 0.0
    %98 = vmatprep.subr.mxu0 0.0
    %99 = vmatpush1.msra.mxu0 0.0
    %100 = vmatprep.subr.mxu0 0.0
    %101 = vmatpush1.msra.mxu0 0.0
    %102 = vmatprep.subr.mxu0 0.0
    %103 = vmatpush1.msra.mxu0 0.0
    %104 = vmatprep.subr.mxu0 0.0
    %105 = vmatpush1.msra.mxu0 0.0
    %106 = vmatprep.subr.mxu0 0.0
    %107 = vmatpush1.msra.mxu0 0.0
    %108 = vmatprep.subr.mxu0 0.0
    %109 = vmatpush1.msra.mxu0 0.0
    %110 = vmatprep.subr.mxu0 0.0
    %111 = vmatpush1.msra.mxu0 %v78
    %112 = vmatprep.subr.mxu0 0.0
    %113 = vmatpush2.msra.mxu0 0.0
    %114 = vmatprep.subr.mxu0 0.0
    %115 = vmatpush2.msra.mxu0 0.0
    %116 = vmatprep.subr.mxu0 0.0
    %117 = vmatpush2.msra.mxu0 0.0
    %118 = vmatprep.subr.mxu0 0.0
    %119 = vmatpush2.msra.mxu0 0.0
    %120 = vmatprep.subr.mxu0 0.0
    %121 = vmatpush2.msra.mxu0 0.0
    %122 = vmatprep.subr.mxu0 0.0
    %123 = vmatpush2.msra.mxu0 0.0
    %124 = vmatprep.subr.mxu0 0.0
    %125 = vmatpush2.msra.mxu0 0.0
    %126 = vmatprep.subr.mxu0 0.0
    %127 = vmatpush2.msra.mxu0 0.0
    %128 = vmatprep.subr.mxu0 0.0
    %129 = vmatpush2.msra.mxu0 0.0
    %130 = vmatprep.subr.mxu0 0.0
    %131 = vmatpush2.msra.mxu0 0.0
    %132 = vmatprep.subr.mxu0 0.0
    %133 = vmatpush2.msra.mxu0 0.0
    %134 = vmatprep.subr.mxu0 0.0
    %135 = vmatpush2.msra.mxu0 0.0
    %136 = vmatprep.subr.mxu0 0.0
    %137 = vmatpush2.msra.mxu0 0.0
    %138 = vmatprep.subr.mxu0 0.0
    %139 = vmatpush2.msra.mxu0 0.0
    %140 = vmatprep.subr.mxu0 0.0
    %141 = vmatpush2.msra.mxu0 0.0
    %142 = vmatprep.subr.mxu0 0.0
    %143 = vmatpush2.msra.mxu0 0.0
    %144 = vmatprep.mubr.f32.mxu0 0.0
    %145 = vmatmul.mubr.f32.gmra.mxu0 %v74
    %v146 = vpop.f32.mrf.mxu0
    %v147 = vadd.f32 0.0, %v146
    %v148 = vpop.f32.mrf.mxu0
    %149 = vdwg.mxu0
    %v151 = vsel %vm72, %v68, 0
    %v154 = vsel %vm76, %v69, 0
    %156 = vmatprep.subr.mxu0 0.0
    %157 = vmatpush1.msra.mxu0 0.0
    %158 = vmatprep.subr.mxu0 0.0
    %159 = vmatpush1.msra.mxu0 0.0
    %160 = vmatprep.subr.mxu0 0.0
    %161 = vmatpush1.msra.mxu0 0.0
    %162 = vmatprep.subr.mxu0 0.0
    %163 = vmatpush1.msra.mxu0 0.0
    %164 = vmatprep.subr.mxu0 0.0
    %165 = vmatpush1.msra.mxu0 0.0
    %166 = vmatprep.subr.mxu0 0.0
    %167 = vmatpush1.msra.mxu0 0.0
    %168 = vmatprep.subr.mxu0 0.0
    %169 = vmatpush1.msra.mxu0 0.0
    %170 = vmatprep.subr.mxu0 0.0
    %171 = vmatpush1.msra.mxu0 0.0
    %172 = vmatprep.subr.mxu0 0.0
    %173 = vmatpush1.msra.mxu0 0.0
    %174 = vmatprep.subr.mxu0 0.0
    %175 = vmatpush1.msra.mxu0 0.0
    %176 = vmatprep.subr.mxu0 0.0
    %177 = vmatpush1.msra.mxu0 0.0
    %178 = vmatprep.subr.mxu0 0.0
    %179 = vmatpush1.msra.mxu0 0.0
    %180 = vmatprep.subr.mxu0 0.0
    %181 = vmatpush1.msra.mxu0 0.0
    %182 = vmatprep.subr.mxu0 0.0
    %183 = vmatpush1.msra.mxu0 0.0
    %184 = vmatprep.subr.mxu0 0.0
    %185 = vmatpush1.msra.mxu0 0.0
    %186 = vmatprep.subr.mxu0 0.0
    %187 = vmatpush1.msra.mxu0 %v154
    %188 = vmatprep.subr.mxu0 0.0
    %189 = vmatpush2.msra.mxu0 0.0
    %190 = vmatprep.subr.mxu0 0.0
    %191 = vmatpush2.msra.mxu0 0.0
    %192 = vmatprep.subr.mxu0 0.0
    %193 = vmatpush2.msra.mxu0 0.0
    %194 = vmatprep.subr.mxu0 0.0
    %195 = vmatpush2.msra.mxu0 0.0
    %196 = vmatprep.subr.mxu0 0.0
    %197 = vmatpush2.msra.mxu0 0.0
    %198 = vmatprep.subr.mxu0 0.0
    %199 = vmatpush2.msra.mxu0 0.0
    %200 = vmatprep.subr.mxu0 0.0
    %201 = vmatpush2.msra.mxu0 0.0
    %202 = vmatprep.subr.mxu0 0.0
    %203 = vmatpush2.msra.mxu0 0.0
    %204 = vmatprep.subr.mxu0 0.0
    %205 = vmatpush2.msra.mxu0 0.0
    %206 = vmatprep.subr.mxu0 0.0
    %207 = vmatpush2.msra.mxu0 0.0
    %208 = vmatprep.subr.mxu0 0.0
    %209 = vmatpush2.msra.mxu0 0.0
    %210 = vmatprep.subr.mxu0 0.0
    %211 = vmatpush2.msra.mxu0 0.0
    %212 = vmatprep.subr.mxu0 0.0
    %213 = vmatpush2.msra.mxu0 0.0
    %214 = vmatprep.subr.mxu0 0.0
    %215 = vmatpush2.msra.mxu0 0.0
    %216 = vmatprep.subr.mxu0 0.0
    %217 = vmatpush2.msra.mxu0 0.0
    %218 = vmatprep.subr.mxu0 0.0
    %219 = vmatpush2.msra.mxu0 0.0
    %220 = vmatprep.mubr.f32.mxu0 0.0
    %221 = vmatmul.mubr.f32.gmra.mxu0 %v151
    %v222 = vpop.f32.mrf.mxu0
    %v223 = vadd.f32 %v147, %v222
    %v224 = vpop.f32.mrf.mxu0
    %225 = vdwg.mxu0
    %v226 = vld [vmem:[%s4] sm:$0x1]
    %v228 = vlaneseq
    %v229 = vshrl.u32 %v228, 7
    %v230 = vsub.s32 0, %v229
    %v231 = vrot.slane %v226, %v230
    %v233 = vadd.f32 %v223, %v231
    %vm234 = vcmask 33792
    %235 = vst.msk [vmem:[#allocation10] sm:$0x3] %vm234, %v233
    // Predicated region
    $region38: #{forward.1} parent=1 // pred_check
      _
    $region39: #{forward.1} parent=1 // pred_check_branch
      %237 = sbr.rel (0) target = $region41
    $region40: #{forward.1} parent=1 // pred_region
      %s239 = ssub.s32 32, 32
      %240 = vsyncadd [#allocation4], %s239
      %s242 = sshll.u32 [#allocation10], 4
      %s243 = int_to_ptr.vmem [resolvable:$true] %s242
      %245 = dma.vmem_to_hbm [thread:$0]  %s243, 32, %s5, [#allocation4]
    $region41: #{forward.1} parent=1 // pred_fallthru
      _
    // Predicated region
    $region42: #{forward.1} parent=1 // pred_check
      _
    $region43: #{forward.1} parent=1 // pred_check_branch
      %247 = sbr.rel (0) target = $region45
    $region44: #{forward.1} parent=1 // pred_region
      %248 = dma.done [#allocation4], 32
    $region45: #{forward.1} parent=1 // pred_fallthru
      _
    %249 = vsyncpa [#allocation3], 1
    %250 = vsyncpa [#allocation6], 1
    %251 = vsyncpa [#allocation9], 1
    %252 = vsyncpa [#allocation4], 1

</llo_original>
